<compile_context>
chip_gen: v6e
topology: v6e:2x2x1
jax: 0.10.0
libtpu: 0.0.40
codegen_flags: <defaults>
</compile_context>

<pallas_src>
import jax
import jax.numpy as jnp
from jax import lax
from jax.experimental import pallas as pl
from jax.experimental.pallas import tpu as pltpu


def bilstm_fc_kernel(x_ref, w_cat_ref, b_cat_ref, w_hh_f_ref,
                     fc_wf_ref, fc_wb_ref, fc_b_ref, out_ref):
    """Fused bi-LSTM(+last-step)+FC+sigmoid.

    x_ref     : (T, B, I)   bf16, time-major, batch pre-padded to 8k rows
    w_cat_ref : (I, 8H)     bf16 [W_ih_fwd | W_ih_bwd], gate order (i, f, o, g)
    b_cat_ref : (1, 8H)     f32 fused (b_ih + b_hh) for both directions
    w_hh_f_ref: (H, 4H)     bf16 forward recurrent weights, order (i, f, o, g)
    fc_wf_ref / fc_wb_ref: (H, 128) f32 fc weights per direction, lane-padded
    fc_b_ref  : (1, 128)    f32 fc bias, lane-padded
    out_ref   : (B, 128)    f32 sigmoid(logits), lane-dense (unmasked vst)
    """
    T, B, I = x_ref.shape
    H = w_hh_f_ref.shape[0]
    GF = 4 * H

    # ---- Hoisted input projection: ONE bf16 MXU matmul for both directions ---
    # (T*B, I) @ (I, 8H), f32 accumulate; fused bias added once (loop-invariant).
    x2d = x_ref[...].reshape(T * B, I)
    gx = jnp.dot(x2d, w_cat_ref[...],
                 preferred_element_type=jnp.float32) + b_cat_ref[...]

    w_hh_f = w_hh_f_ref[...]                       # (H, 4H) bf16, loaded once

    h = jnp.zeros((B, H), jnp.float32)
    c = jnp.zeros((B, H), jnp.float32)

    # ---- Forward recurrence: fully unrolled (T static, tiny) ----------------
    # Pre-activations for step t come straight from gx via a static slice and
    # stay in vregs; only h @ W_hh + the gate nonlinearities are serial.
    for t in range(T):
        g = gx[t * B:(t + 1) * B, :GF] + jnp.dot(
            h.astype(jnp.bfloat16), w_hh_f, preferred_element_type=jnp.float32)
        ifo = jax.nn.sigmoid(g[:, :3 * H])         # one fused sigmoid: i, f, o
        gg = jnp.tanh(g[:, 3 * H:])                # cell gate
        c = ifo[:, H:2 * H] * c + ifo[:, :H] * gg
        h = ifo[:, 2 * H:] * jnp.tanh(c)

    # ---- Backward direction ---------------------------------------------------
    # fc only consumes lstm_out[:, -1, H:]; with zero initial state that is the
    # reverse LSTM's FIRST step on x[:, T-1], so h @ W_hh_b == 0 and a single
    # step (reusing the hoisted projection) is exact.
    gb = gx[(T - 1) * B:, GF:]                     # (B, 4H)
    ifo_b = jax.nn.sigmoid(gb[:, :3 * H])
    gg_b = jnp.tanh(gb[:, 3 * H:])
    c_b = ifo_b[:, :H] * gg_b                      # f * c0 == 0
    h_bwd = ifo_b[:, 2 * H:] * jnp.tanh(c_b)

    # ---- FC + sigmoid epilogue: no concat, lane-dense (128-wide) output ------
    logits = (jnp.dot(h, fc_wf_ref[...], preferred_element_type=jnp.float32)
              + jnp.dot(h_bwd, fc_wb_ref[...], preferred_element_type=jnp.float32)
              + fc_b_ref[...])
    out_ref[...] = jax.nn.sigmoid(logits)


def lstm_model_forward(x, params):
    """x: (B, T, I) float32, batch_first like the PyTorch module."""
    (w_ih_f, w_hh_f, b_ih_f, b_hh_f,
     w_ih_b, w_hh_b, b_ih_b, b_hh_b,
     fc_w, fc_b) = params

    B, T, I = x.shape
    H = w_hh_f.shape[1]
    O = fc_w.shape[0]

    # Permute PyTorch gate order (i, f, g, o) -> (i, f, o, g): the three
    # sigmoid gates become one contiguous [0:3H) slab, tanh gate last.
    perm = jnp.concatenate([jnp.arange(0, 2 * H),
                            jnp.arange(3 * H, 4 * H),
                            jnp.arange(2 * H, 3 * H)])

    def prep(w_ih, w_hh, b_ih, b_hh):
        return (jnp.transpose(w_ih[perm]),            # (I, 4H)
                jnp.transpose(w_hh[perm]),            # (H, 4H)
                (b_ih + b_hh)[perm][None, :])         # (1, 4H) fused bias (f32)

    w_ih_f_t, w_hh_f_t, b_f = prep(w_ih_f, w_hh_f, b_ih_f, b_hh_f)
    w_ih_b_t, _w_hh_b_t, b_b = prep(w_ih_b, w_hh_b, b_ih_b, b_hh_b)
    # _w_hh_b_t intentionally unused: the backward direction's only needed step
    # starts from a zero state, so its recurrent matmul contributes nothing.

    # bf16 MXU operands for the matmuls; biases / state / gate math stay f32.
    w_cat = jnp.concatenate([w_ih_f_t, w_ih_b_t], axis=1).astype(jnp.bfloat16)
    b_cat = jnp.concatenate([b_f, b_b], axis=1)               # (1, 8H) f32
    w_hh_f_bf = w_hh_f_t.astype(jnp.bfloat16)                 # (H, 4H)

    # Lane-dense FC epilogue: pad the output dimension to 128 lanes.
    O_pad = 128
    fc_wf = jnp.pad(jnp.transpose(fc_w[:, :H]), ((0, 0), (0, O_pad - O)))  # (H,128)
    fc_wb = jnp.pad(jnp.transpose(fc_w[:, H:]), ((0, 0), (0, O_pad - O)))  # (H,128)
    fc_b2 = jnp.pad(fc_b[None, :], ((0, 0), (0, O_pad - O)))               # (1,128)

    # Pad the batch to a multiple of 8 sublanes (state/gates stay f32), go
    # time-major, and cast to bf16 in ONE fused XLA copy, so every in-kernel
    # load is a contiguous, (8,128)-tile-friendly leading-axis access.
    B_pad = ((B + 7) // 8) * 8
    x_tm = jnp.transpose(jnp.pad(x, ((0, B_pad - B), (0, 0), (0, 0))),
                         (1, 0, 2)).astype(jnp.bfloat16)       # (T, B_pad, I)

    vmem = pl.BlockSpec(memory_space=pltpu.MemorySpace.VMEM)
    out = pl.pallas_call(
        bilstm_fc_kernel,
        out_shape=jax.ShapeDtypeStruct((B_pad, O_pad), jnp.float32),
        in_specs=[vmem] * 7,
        out_specs=vmem,
        compiler_params=pltpu.CompilerParams(
            vmem_limit_bytes=32 * 1024 * 1024),
    )(x_tm, w_cat, b_cat, w_hh_f_bf, fc_wf, fc_wb, fc_b2)

    return out[:B, :O]


def _reference_forward(x, params):
    """Pure-JAX f32 bidirectional LSTM reference (full backward pass)."""
    (w_ih_f, w_hh_f, b_ih_f, b_hh_f,
     w_ih_b, w_hh_b, b_ih_b, b_hh_b,
     fc_w, fc_b) = params
    B, T, I = x.shape
    H = w_hh_f.shape[1]

    def run(xs, w_ih, w_hh, b_ih, b_hh):
        def step(carry, x_t):
            h, c = carry
            gates = x_t @ w_ih.T + b_ih + h @ w_hh.T + b_hh
            i = jax.nn.sigmoid(gates[:, :H])
            f = jax.nn.sigmoid(gates[:, H:2 * H])
            g = jnp.tanh(gates[:, 2 * H:3 * H])
            o = jax.nn.sigmoid(gates[:, 3 * H:])
            c = f * c + i * g
            h = o * jnp.tanh(c)
            return (h, c), h
        init = (jnp.zeros((B, H)), jnp.zeros((B, H)))
        _, hs = lax.scan(step, init, xs)
        return hs                                        # (T, B, H)

    xs = jnp.transpose(x, (1, 0, 2))
    hs_f = run(xs, w_ih_f, w_hh_f, b_ih_f, b_hh_f)
    hs_b = run(xs[::-1], w_ih_b, w_hh_b, b_ih_b, b_hh_b)[::-1]
    last = jnp.concatenate([hs_f[-1], hs_b[-1]], axis=-1)
    return jax.nn.sigmoid(last @ fc_w.T + fc_b)


def _init_params(key, input_size, hidden_size, output_size):
    H, I, O = hidden_size, input_size, output_size
    ks = jax.random.split(key, 10)
    s = 1.0 / jnp.sqrt(H)
    sf = 1.0 / jnp.sqrt(2 * H)
    u = lambda k, shape, scale: jax.random.uniform(
        k, shape, jnp.float32, minval=-scale, maxval=scale)
    return (
        u(ks[0], (4 * H, I), s), u(ks[1], (4 * H, H), s),
        u(ks[2], (4 * H,), s), u(ks[3], (4 * H,), s),
        u(ks[4], (4 * H, I), s), u(ks[5], (4 * H, H), s),
        u(ks[6], (4 * H,), s), u(ks[7], (4 * H,), s),
        u(ks[8], (O, 2 * H), sf), u(ks[9], (O,), sf),
    )


if __name__ == "__main__":
    B, T, I, H, O = 2, 8, 16, 32, 4
    key = jax.random.PRNGKey(0)
    k_x, k_p = jax.random.split(key)
    x = jax.random.normal(k_x, (B, T, I), jnp.float32)
    params = _init_params(k_p, I, H, O)

    out = jax.block_until_ready(lstm_model_forward(x, params))
    ref = _reference_forward(x, params)

    assert out.shape == (B, O)
    # bf16 MXU operands vs. pure-f32 reference: sigmoid outputs in [0, 1],
    # drift is well under this tolerance (state / biases / gate math are f32).
    assert jnp.allclose(out, ref, atol=2e-2, rtol=0), "mismatch vs reference"
    print("KERNEL_OK")
</pallas_src>

<mosaic_0001>
module attributes {stable_mosaic.version = 11 : i64} {
  func.func @bilstm_fc_kernel(%arg0: memref<8x8x16xbf16, #tpu.memory_space<vmem>>, %arg1: memref<16x256xbf16, #tpu.memory_space<vmem>>, %arg2: memref<1x256xf32, #tpu.memory_space<vmem>>, %arg3: memref<32x128xbf16, #tpu.memory_space<vmem>>, %arg4: memref<32x128xf32, #tpu.memory_space<vmem>>, %arg5: memref<32x128xf32, #tpu.memory_space<vmem>>, %arg6: memref<1x128xf32, #tpu.memory_space<vmem>>, %arg7: memref<8x128xf32, #tpu.memory_space<vmem>>) attributes {dimension_semantics = [], scalar_prefetch = 0 : i64, scratch_operands = 0 : i64, tpu.core_type = #tpu.core_type<tc>} {
    %c0 = arith.constant 0 : index
    %c0_0 = arith.constant 0 : index
    %c0_1 = arith.constant 0 : index
    %0 = vector.load %arg0[%c0, %c0_0, %c0_1] : memref<8x8x16xbf16, #tpu.memory_space<vmem>>, vector<8x8x16xbf16>
    %1 = vector.shape_cast %0 : vector<8x8x16xbf16> to vector<64x16xbf16>
    %c0_2 = arith.constant 0 : index
    %c0_3 = arith.constant 0 : index
    %2 = vector.load %arg1[%c0_2, %c0_3] : memref<16x256xbf16, #tpu.memory_space<vmem>>, vector<16x256xbf16>
    %cst = arith.constant dense<0.000000e+00> : vector<64x256xf32>
    %3 = tpu.matmul %1, %2, %cst {dimension_numbers = #tpu.dot_dimension_numbers<[1], [0], [0], [1], [0, 0, 1, 1], [], []>} : vector<64x16xbf16>, vector<16x256xbf16>, vector<64x256xf32> -> vector<64x256xf32>
    %c0_4 = arith.constant 0 : index
    %c0_5 = arith.constant 0 : index
    %4 = vector.load %arg2[%c0_4, %c0_5] : memref<1x256xf32, #tpu.memory_space<vmem>>, vector<1x256xf32>
    %5 = vector.broadcast %4 : vector<1x256xf32> to vector<64x256xf32>
    %6 = arith.addf %3, %5 : vector<64x256xf32>
    %c0_6 = arith.constant 0 : index
    %c0_7 = arith.constant 0 : index
    %7 = vector.load %arg3[%c0_6, %c0_7] : memref<32x128xbf16, #tpu.memory_space<vmem>>, vector<32x128xbf16>
    %cst_8 = arith.constant 0.000000e+00 : f32
    %8 = vector.broadcast %cst_8 : f32 to vector<8x32xf32>
    %cst_9 = arith.constant 0.000000e+00 : f32
    %9 = vector.broadcast %cst_9 : f32 to vector<8x32xf32>
    %10 = vector.extract_strided_slice %6 {offsets = [0, 0], sizes = [8, 128], strides = [1, 1]} : vector<64x256xf32> to vector<8x128xf32>
    %11 = arith.truncf %8 : vector<8x32xf32> to vector<8x32xbf16>
    %cst_10 = arith.constant dense<0.000000e+00> : vector<8x128xf32>
    %12 = tpu.matmul %11, %7, %cst_10 {dimension_numbers = #tpu.dot_dimension_numbers<[1], [0], [0], [1], [0, 0, 1, 1], [], []>} : vector<8x32xbf16>, vector<32x128xbf16>, vector<8x128xf32> -> vector<8x128xf32>
    %13 = arith.addf %10, %12 : vector<8x128xf32>
    %14 = vector.extract_strided_slice %13 {offsets = [0, 0], sizes = [8, 96], strides = [1, 1]} : vector<8x128xf32> to vector<8x96xf32>
    %15 = arith.negf %14 : vector<8x96xf32>
    %16 = math.exp %15 : vector<8x96xf32>
    %cst_11 = arith.constant 1.000000e+00 : f32
    %17 = vector.broadcast %cst_11 : f32 to vector<8x96xf32>
    %18 = arith.addf %17, %16 : vector<8x96xf32>
    %19 = arith.divf %17, %18 : vector<8x96xf32>
    %20 = vector.extract_strided_slice %13 {offsets = [0, 96], sizes = [8, 32], strides = [1, 1]} : vector<8x128xf32> to vector<8x32xf32>
    %21 = math.tanh %20 : vector<8x32xf32>
    %22 = vector.extract_strided_slice %19 {offsets = [0, 32], sizes = [8, 32], strides = [1, 1]} : vector<8x96xf32> to vector<8x32xf32>
    %23 = arith.mulf %22, %9 : vector<8x32xf32>
    %24 = vector.extract_strided_slice %19 {offsets = [0, 0], sizes = [8, 32], strides = [1, 1]} : vector<8x96xf32> to vector<8x32xf32>
    %25 = arith.mulf %24, %21 : vector<8x32xf32>
    %26 = arith.addf %23, %25 : vector<8x32xf32>
    %27 = vector.extract_strided_slice %19 {offsets = [0, 64], sizes = [8, 32], strides = [1, 1]} : vector<8x96xf32> to vector<8x32xf32>
    %28 = math.tanh %26 : vector<8x32xf32>
    %29 = arith.mulf %27, %28 : vector<8x32xf32>
    %30 = vector.extract_strided_slice %6 {offsets = [8, 0], sizes = [8, 128], strides = [1, 1]} : vector<64x256xf32> to vector<8x128xf32>
    %31 = arith.truncf %29 : vector<8x32xf32> to vector<8x32xbf16>
    %cst_12 = arith.constant dense<0.000000e+00> : vector<8x128xf32>
    %32 = tpu.matmul %31, %7, %cst_12 {dimension_numbers = #tpu.dot_dimension_numbers<[1], [0], [0], [1], [0, 0, 1, 1], [], []>} : vector<8x32xbf16>, vector<32x128xbf16>, vector<8x128xf32> -> vector<8x128xf32>
    %33 = arith.addf %30, %32 : vector<8x128xf32>
    %34 = vector.extract_strided_slice %33 {offsets = [0, 0], sizes = [8, 96], strides = [1, 1]} : vector<8x128xf32> to vector<8x96xf32>
    %35 = arith.negf %34 : vector<8x96xf32>
    %36 = math.exp %35 : vector<8x96xf32>
    %cst_13 = arith.constant 1.000000e+00 : f32
    %37 = vector.broadcast %cst_13 : f32 to vector<8x96xf32>
    %38 = arith.addf %37, %36 : vector<8x96xf32>
    %39 = arith.divf %37, %38 : vector<8x96xf32>
    %40 = vector.extract_strided_slice %33 {offsets = [0, 96], sizes = [8, 32], strides = [1, 1]} : vector<8x128xf32> to vector<8x32xf32>
    %41 = math.tanh %40 : vector<8x32xf32>
    %42 = vector.extract_strided_slice %39 {offsets = [0, 32], sizes = [8, 32], strides = [1, 1]} : vector<8x96xf32> to vector<8x32xf32>
    %43 = arith.mulf %42, %26 : vector<8x32xf32>
    %44 = vector.extract_strided_slice %39 {offsets = [0, 0], sizes = [8, 32], strides = [1, 1]} : vector<8x96xf32> to vector<8x32xf32>
    %45 = arith.mulf %44, %41 : vector<8x32xf32>
    %46 = arith.addf %43, %45 : vector<8x32xf32>
    %47 = vector.extract_strided_slice %39 {offsets = [0, 64], sizes = [8, 32], strides = [1, 1]} : vector<8x96xf32> to vector<8x32xf32>
    %48 = math.tanh %46 : vector<8x32xf32>
    %49 = arith.mulf %47, %48 : vector<8x32xf32>
    %50 = vector.extract_strided_slice %6 {offsets = [16, 0], sizes = [8, 128], strides = [1, 1]} : vector<64x256xf32> to vector<8x128xf32>
    %51 = arith.truncf %49 : vector<8x32xf32> to vector<8x32xbf16>
    %cst_14 = arith.constant dense<0.000000e+00> : vector<8x128xf32>
    %52 = tpu.matmul %51, %7, %cst_14 {dimension_numbers = #tpu.dot_dimension_numbers<[1], [0], [0], [1], [0, 0, 1, 1], [], []>} : vector<8x32xbf16>, vector<32x128xbf16>, vector<8x128xf32> -> vector<8x128xf32>
    %53 = arith.addf %50, %52 : vector<8x128xf32>
    %54 = vector.extract_strided_slice %53 {offsets = [0, 0], sizes = [8, 96], strides = [1, 1]} : vector<8x128xf32> to vector<8x96xf32>
    %55 = arith.negf %54 : vector<8x96xf32>
    %56 = math.exp %55 : vector<8x96xf32>
    %cst_15 = arith.constant 1.000000e+00 : f32
    %57 = vector.broadcast %cst_15 : f32 to vector<8x96xf32>
    %58 = arith.addf %57, %56 : vector<8x96xf32>
    %59 = arith.divf %57, %58 : vector<8x96xf32>
    %60 = vector.extract_strided_slice %53 {offsets = [0, 96], sizes = [8, 32], strides = [1, 1]} : vector<8x128xf32> to vector<8x32xf32>
    %61 = math.tanh %60 : vector<8x32xf32>
    %62 = vector.extract_strided_slice %59 {offsets = [0, 32], sizes = [8, 32], strides = [1, 1]} : vector<8x96xf32> to vector<8x32xf32>
    %63 = arith.mulf %62, %46 : vector<8x32xf32>
    %64 = vector.extract_strided_slice %59 {offsets = [0, 0], sizes = [8, 32], strides = [1, 1]} : vector<8x96xf32> to vector<8x32xf32>
    %65 = arith.mulf %64, %61 : vector<8x32xf32>
    %66 = arith.addf %63, %65 : vector<8x32xf32>
    %67 = vector.extract_strided_slice %59 {offsets = [0, 64], sizes = [8, 32], strides = [1, 1]} : vector<8x96xf32> to vector<8x32xf32>
    %68 = math.tanh %66 : vector<8x32xf32>
    %69 = arith.mulf %67, %68 : vector<8x32xf32>
    %70 = vector.extract_strided_slice %6 {offsets = [24, 0], sizes = [8, 128], strides = [1, 1]} : vector<64x256xf32> to vector<8x128xf32>
    %71 = arith.truncf %69 : vector<8x32xf32> to vector<8x32xbf16>
    %cst_16 = arith.constant dense<0.000000e+00> : vector<8x128xf32>
    %72 = tpu.matmul %71, %7, %cst_16 {dimension_numbers = #tpu.dot_dimension_numbers<[1], [0], [0], [1], [0, 0, 1, 1], [], []>} : vector<8x32xbf16>, vector<32x128xbf16>, vector<8x128xf32> -> vector<8x128xf32>
    %73 = arith.addf %70, %72 : vector<8x128xf32>
    %74 = vector.extract_strided_slice %73 {offsets = [0, 0], sizes = [8, 96], strides = [1, 1]} : vector<8x128xf32> to vector<8x96xf32>
    %75 = arith.negf %74 : vector<8x96xf32>
    %76 = math.exp %75 : vector<8x96xf32>
    %cst_17 = arith.constant 1.000000e+00 : f32
    %77 = vector.broadcast %cst_17 : f32 to vector<8x96xf32>
    %78 = arith.addf %77, %76 : vector<8x96xf32>
    %79 = arith.divf %77, %78 : vector<8x96xf32>
    %80 = vector.extract_strided_slice %73 {offsets = [0, 96], sizes = [8, 32], strides = [1, 1]} : vector<8x128xf32> to vector<8x32xf32>
    %81 = math.tanh %80 : vector<8x32xf32>
    %82 = vector.extract_strided_slice %79 {offsets = [0, 32], sizes = [8, 32], strides = [1, 1]} : vector<8x96xf32> to vector<8x32xf32>
    %83 = arith.mulf %82, %66 : vector<8x32xf32>
    %84 = vector.extract_strided_slice %79 {offsets = [0, 0], sizes = [8, 32], strides = [1, 1]} : vector<8x96xf32> to vector<8x32xf32>
    %85 = arith.mulf %84, %81 : vector<8x32xf32>
    %86 = arith.addf %83, %85 : vector<8x32xf32>
    %87 = vector.extract_strided_slice %79 {offsets = [0, 64], sizes = [8, 32], strides = [1, 1]} : vector<8x96xf32> to vector<8x32xf32>
    %88 = math.tanh %86 : vector<8x32xf32>
    %89 = arith.mulf %87, %88 : vector<8x32xf32>
    %90 = vector.extract_strided_slice %6 {offsets = [32, 0], sizes = [8, 128], strides = [1, 1]} : vector<64x256xf32> to vector<8x128xf32>
    %91 = arith.truncf %89 : vector<8x32xf32> to vector<8x32xbf16>
    %cst_18 = arith.constant dense<0.000000e+00> : vector<8x128xf32>
    %92 = tpu.matmul %91, %7, %cst_18 {dimension_numbers = #tpu.dot_dimension_numbers<[1], [0], [0], [1], [0, 0, 1, 1], [], []>} : vector<8x32xbf16>, vector<32x128xbf16>, vector<8x128xf32> -> vector<8x128xf32>
    %93 = arith.addf %90, %92 : vector<8x128xf32>
    %94 = vector.extract_strided_slice %93 {offsets = [0, 0], sizes = [8, 96], strides = [1, 1]} : vector<8x128xf32> to vector<8x96xf32>
    %95 = arith.negf %94 : vector<8x96xf32>
    %96 = math.exp %95 : vector<8x96xf32>
    %cst_19 = arith.constant 1.000000e+00 : f32
    %97 = vector.broadcast %cst_19 : f32 to vector<8x96xf32>
    %98 = arith.addf %97, %96 : vector<8x96xf32>
    %99 = arith.divf %97, %98 : vector<8x96xf32>
    %100 = vector.extract_strided_slice %93 {offsets = [0, 96], sizes = [8, 32], strides = [1, 1]} : vector<8x128xf32> to vector<8x32xf32>
    %101 = math.tanh %100 : vector<8x32xf32>
    %102 = vector.extract_strided_slice %99 {offsets = [0, 32], sizes = [8, 32], strides = [1, 1]} : vector<8x96xf32> to vector<8x32xf32>
    %103 = arith.mulf %102, %86 : vector<8x32xf32>
    %104 = vector.extract_strided_slice %99 {offsets = [0, 0], sizes = [8, 32], strides = [1, 1]} : vector<8x96xf32> to vector<8x32xf32>
    %105 = arith.mulf %104, %101 : vector<8x32xf32>
    %106 = arith.addf %103, %105 : vector<8x32xf32>
    %107 = vector.extract_strided_slice %99 {offsets = [0, 64], sizes = [8, 32], strides = [1, 1]} : vector<8x96xf32> to vector<8x32xf32>
    %108 = math.tanh %106 : vector<8x32xf32>
    %109 = arith.mulf %107, %108 : vector<8x32xf32>
    %110 = vector.extract_strided_slice %6 {offsets = [40, 0], sizes = [8, 128], strides = [1, 1]} : vector<64x256xf32> to vector<8x128xf32>
    %111 = arith.truncf %109 : vector<8x32xf32> to vector<8x32xbf16>
    %cst_20 = arith.constant dense<0.000000e+00> : vector<8x128xf32>
    %112 = tpu.matmul %111, %7, %cst_20 {dimension_numbers = #tpu.dot_dimension_numbers<[1], [0], [0], [1], [0, 0, 1, 1], [], []>} : vector<8x32xbf16>, vector<32x128xbf16>, vector<8x128xf32> -> vector<8x128xf32>
    %113 = arith.addf %110, %112 : vector<8x128xf32>
    %114 = vector.extract_strided_slice %113 {offsets = [0, 0], sizes = [8, 96], strides = [1, 1]} : vector<8x128xf32> to vector<8x96xf32>
    %115 = arith.negf %114 : vector<8x96xf32>
    %116 = math.exp %115 : vector<8x96xf32>
    %cst_21 = arith.constant 1.000000e+00 : f32
    %117 = vector.broadcast %cst_21 : f32 to vector<8x96xf32>
    %118 = arith.addf %117, %116 : vector<8x96xf32>
    %119 = arith.divf %117, %118 : vector<8x96xf32>
    %120 = vector.extract_strided_slice %113 {offsets = [0, 96], sizes = [8, 32], strides = [1, 1]} : vector<8x128xf32> to vector<8x32xf32>
    %121 = math.tanh %120 : vector<8x32xf32>
    %122 = vector.extract_strided_slice %119 {offsets = [0, 32], sizes = [8, 32], strides = [1, 1]} : vector<8x96xf32> to vector<8x32xf32>
    %123 = arith.mulf %122, %106 : vector<8x32xf32>
    %124 = vector.extract_strided_slice %119 {offsets = [0, 0], sizes = [8, 32], strides = [1, 1]} : vector<8x96xf32> to vector<8x32xf32>
    %125 = arith.mulf %124, %121 : vector<8x32xf32>
    %126 = arith.addf %123, %125 : vector<8x32xf32>
    %127 = vector.extract_strided_slice %119 {offsets = [0, 64], sizes = [8, 32], strides = [1, 1]} : vector<8x96xf32> to vector<8x32xf32>
    %128 = math.tanh %126 : vector<8x32xf32>
    %129 = arith.mulf %127, %128 : vector<8x32xf32>
    %130 = vector.extract_strided_slice %6 {offsets = [48, 0], sizes = [8, 128], strides = [1, 1]} : vector<64x256xf32> to vector<8x128xf32>
    %131 = arith.truncf %129 : vector<8x32xf32> to vector<8x32xbf16>
    %cst_22 = arith.constant dense<0.000000e+00> : vector<8x128xf32>
    %132 = tpu.matmul %131, %7, %cst_22 {dimension_numbers = #tpu.dot_dimension_numbers<[1], [0], [0], [1], [0, 0, 1, 1], [], []>} : vector<8x32xbf16>, vector<32x128xbf16>, vector<8x128xf32> -> vector<8x128xf32>
    %133 = arith.addf %130, %132 : vector<8x128xf32>
    %134 = vector.extract_strided_slice %133 {offsets = [0, 0], sizes = [8, 96], strides = [1, 1]} : vector<8x128xf32> to vector<8x96xf32>
    %135 = arith.negf %134 : vector<8x96xf32>
    %136 = math.exp %135 : vector<8x96xf32>
    %cst_23 = arith.constant 1.000000e+00 : f32
    %137 = vector.broadcast %cst_23 : f32 to vector<8x96xf32>
    %138 = arith.addf %137, %136 : vector<8x96xf32>
    %139 = arith.divf %137, %138 : vector<8x96xf32>
    %140 = vector.extract_strided_slice %133 {offsets = [0, 96], sizes = [8, 32], strides = [1, 1]} : vector<8x128xf32> to vector<8x32xf32>
    %141 = math.tanh %140 : vector<8x32xf32>
    %142 = vector.extract_strided_slice %139 {offsets = [0, 32], sizes = [8, 32], strides = [1, 1]} : vector<8x96xf32> to vector<8x32xf32>
    %143 = arith.mulf %142, %126 : vector<8x32xf32>
    %144 = vector.extract_strided_slice %139 {offsets = [0, 0], sizes = [8, 32], strides = [1, 1]} : vector<8x96xf32> to vector<8x32xf32>
    %145 = arith.mulf %144, %141 : vector<8x32xf32>
    %146 = arith.addf %143, %145 : vector<8x32xf32>
    %147 = vector.extract_strided_slice %139 {offsets = [0, 64], sizes = [8, 32], strides = [1, 1]} : vector<8x96xf32> to vector<8x32xf32>
    %148 = math.tanh %146 : vector<8x32xf32>
    %149 = arith.mulf %147, %148 : vector<8x32xf32>
    %150 = vector.extract_strided_slice %6 {offsets = [56, 0], sizes = [8, 128], strides = [1, 1]} : vector<64x256xf32> to vector<8x128xf32>
    %151 = arith.truncf %149 : vector<8x32xf32> to vector<8x32xbf16>
    %cst_24 = arith.constant dense<0.000000e+00> : vector<8x128xf32>
    %152 = tpu.matmul %151, %7, %cst_24 {dimension_numbers = #tpu.dot_dimension_numbers<[1], [0], [0], [1], [0, 0, 1, 1], [], []>} : vector<8x32xbf16>, vector<32x128xbf16>, vector<8x128xf32> -> vector<8x128xf32>
    %153 = arith.addf %150, %152 : vector<8x128xf32>
    %154 = vector.extract_strided_slice %153 {offsets = [0, 0], sizes = [8, 96], strides = [1, 1]} : vector<8x128xf32> to vector<8x96xf32>
    %155 = arith.negf %154 : vector<8x96xf32>
    %156 = math.exp %155 : vector<8x96xf32>
    %cst_25 = arith.constant 1.000000e+00 : f32
    %157 = vector.broadcast %cst_25 : f32 to vector<8x96xf32>
    %158 = arith.addf %157, %156 : vector<8x96xf32>
    %159 = arith.divf %157, %158 : vector<8x96xf32>
    %160 = vector.extract_strided_slice %153 {offsets = [0, 96], sizes = [8, 32], strides = [1, 1]} : vector<8x128xf32> to vector<8x32xf32>
    %161 = math.tanh %160 : vector<8x32xf32>
    %162 = vector.extract_strided_slice %159 {offsets = [0, 32], sizes = [8, 32], strides = [1, 1]} : vector<8x96xf32> to vector<8x32xf32>
    %163 = arith.mulf %162, %146 : vector<8x32xf32>
    %164 = vector.extract_strided_slice %159 {offsets = [0, 0], sizes = [8, 32], strides = [1, 1]} : vector<8x96xf32> to vector<8x32xf32>
    %165 = arith.mulf %164, %161 : vector<8x32xf32>
    %166 = arith.addf %163, %165 : vector<8x32xf32>
    %167 = vector.extract_strided_slice %159 {offsets = [0, 64], sizes = [8, 32], strides = [1, 1]} : vector<8x96xf32> to vector<8x32xf32>
    %168 = math.tanh %166 : vector<8x32xf32>
    %169 = arith.mulf %167, %168 : vector<8x32xf32>
    %170 = vector.extract_strided_slice %6 {offsets = [56, 128], sizes = [8, 128], strides = [1, 1]} : vector<64x256xf32> to vector<8x128xf32>
    %171 = vector.extract_strided_slice %170 {offsets = [0, 0], sizes = [8, 96], strides = [1, 1]} : vector<8x128xf32> to vector<8x96xf32>
    %172 = arith.negf %171 : vector<8x96xf32>
    %173 = math.exp %172 : vector<8x96xf32>
    %cst_26 = arith.constant 1.000000e+00 : f32
    %174 = vector.broadcast %cst_26 : f32 to vector<8x96xf32>
    %175 = arith.addf %174, %173 : vector<8x96xf32>
    %176 = arith.divf %174, %175 : vector<8x96xf32>
    %177 = vector.extract_strided_slice %170 {offsets = [0, 96], sizes = [8, 32], strides = [1, 1]} : vector<8x128xf32> to vector<8x32xf32>
    %178 = math.tanh %177 : vector<8x32xf32>
    %179 = vector.extract_strided_slice %176 {offsets = [0, 0], sizes = [8, 32], strides = [1, 1]} : vector<8x96xf32> to vector<8x32xf32>
    %180 = arith.mulf %179, %178 : vector<8x32xf32>
    %181 = vector.extract_strided_slice %176 {offsets = [0, 64], sizes = [8, 32], strides = [1, 1]} : vector<8x96xf32> to vector<8x32xf32>
    %182 = math.tanh %180 : vector<8x32xf32>
    %183 = arith.mulf %181, %182 : vector<8x32xf32>
    %c0_27 = arith.constant 0 : index
    %c0_28 = arith.constant 0 : index
    %184 = vector.load %arg4[%c0_27, %c0_28] : memref<32x128xf32, #tpu.memory_space<vmem>>, vector<32x128xf32>
    %cst_29 = arith.constant dense<0.000000e+00> : vector<8x128xf32>
    %185 = tpu.matmul %169, %184, %cst_29 {dimension_numbers = #tpu.dot_dimension_numbers<[1], [0], [0], [1], [0, 0, 1, 1], [], []>} : vector<8x32xf32>, vector<32x128xf32>, vector<8x128xf32> -> vector<8x128xf32>
    %c0_30 = arith.constant 0 : index
    %c0_31 = arith.constant 0 : index
    %186 = vector.load %arg5[%c0_30, %c0_31] : memref<32x128xf32, #tpu.memory_space<vmem>>, vector<32x128xf32>
    %cst_32 = arith.constant dense<0.000000e+00> : vector<8x128xf32>
    %187 = tpu.matmul %183, %186, %cst_32 {dimension_numbers = #tpu.dot_dimension_numbers<[1], [0], [0], [1], [0, 0, 1, 1], [], []>} : vector<8x32xf32>, vector<32x128xf32>, vector<8x128xf32> -> vector<8x128xf32>
    %188 = arith.addf %185, %187 : vector<8x128xf32>
    %c0_33 = arith.constant 0 : index
    %c0_34 = arith.constant 0 : index
    %189 = vector.load %arg6[%c0_33, %c0_34] : memref<1x128xf32, #tpu.memory_space<vmem>>, vector<1x128xf32>
    %190 = vector.broadcast %189 : vector<1x128xf32> to vector<8x128xf32>
    %191 = arith.addf %188, %190 : vector<8x128xf32>
    %192 = arith.negf %191 : vector<8x128xf32>
    %193 = math.exp %192 : vector<8x128xf32>
    %cst_35 = arith.constant 1.000000e+00 : f32
    %194 = vector.broadcast %cst_35 : f32 to vector<8x128xf32>
    %195 = arith.addf %194, %193 : vector<8x128xf32>
    %196 = arith.divf %194, %195 : vector<8x128xf32>
    %c0_36 = arith.constant 0 : index
    %c0_37 = arith.constant 0 : index
    %197 = vector.load %arg7[%c0_36, %c0_37] : memref<8x128xf32, #tpu.memory_space<vmem>>, vector<8x128xf32>
    tpu.vector_store %arg7[%c0_36, %c0_37], %196 {strides = array<i32>} : memref<8x128xf32, #tpu.memory_space<vmem>>, vector<8x128xf32>,
    return
  }
}

</mosaic_0001>

<llo_original>
// kernel: tpu_custom_call.1
$region0: #{tpu_custom_call.1}
  #allocation0 [shape = 'u32[]', space=smem, size = 0x4, offset = 0x4, fixed_abs, tag = 'smem constant byte address 0x4 - core index']
  #allocation1 [shape = 'u32[144,128]{1,0:T(1,128)}', space=vmem, size = 0x12000, scoped, tag = 'internal scratch']
  %s0 = inlined_call_operand.hbm [shape: bf16[8,8,16], index: 0, kind: input, shape index: {}]
  %s1 = inlined_call_operand.hbm [shape: bf16[16,256], index: 1, kind: input, shape index: {}]
  %s2 = inlined_call_operand.vmem [shape: f32[1,256], index: 2, kind: input, shape index: {}]
  %s3 = inlined_call_operand.hbm [shape: bf16[32,128], index: 3, kind: input, shape index: {}]
  %s4 = inlined_call_operand.hbm [shape: f32[32,128], index: 4, kind: input, shape index: {}]
  %s5 = inlined_call_operand.hbm [shape: f32[32,128], index: 5, kind: input, shape index: {}]
  %s6 = inlined_call_operand.vmem [shape: f32[1,128], index: 6, kind: input, shape index: {}]
  %s7 = inlined_call_operand.hbm [shape: f32[8,128], index: 7, kind: output, shape index: {}]
  %s8 = sld [smem:[#allocation0]]
  $region58: #{tpu_custom_call.1} parent=0
    _
  %s10 = ssub.s32 1, %s8
  %s11 = scalar_select 0, %s10, %s8
  $region1: #{tpu_custom_call.1} parent=0
    #allocation2 [shape = 'u8[16384]{0}', space=vmem, size = 0x4000, scoped, tag = 'input window, operand 0, single buffered']
    #allocation3 [shape = 's32[1]{0}', space=sflag, size = 0x4, scoped, tag = 'scoped memory for tpu_custom_call.1']
    #allocation4 [shape = 's32[1]{0}', space=sflag, size = 0x4, scoped, tag = 'scoped memory for tpu_custom_call.1']
    #allocation5 [shape = 'u8[8192]{0}', space=vmem, size = 0x2000, scoped, tag = 'input window, operand 1, single buffered']
    #allocation6 [shape = 's32[1]{0}', space=sflag, size = 0x4, scoped, tag = 'scoped memory for tpu_custom_call.1']
    #allocation7 [shape = 'u8[8192]{0}', space=vmem, size = 0x2000, scoped, tag = 'input window, operand 3, single buffered']
    #allocation8 [shape = 'u8[16384]{0}', space=vmem, size = 0x4000, scoped, tag = 'input window, operand 4, single buffered']
    #allocation9 [shape = 's32[1]{0}', space=sflag, size = 0x4, scoped, tag = 'scoped memory for tpu_custom_call.1']
    #allocation10 [shape = 'u8[16384]{0}', space=vmem, size = 0x4000, scoped, tag = 'input window, operand 5, single buffered']
    #allocation11 [shape = 'u8[4096]{0}', space=vmem, size = 0x1000, scoped, tag = 'output window, operand 0, single buffered']
    %12 = vsyncpa [#allocation3], 0
    %13 = vsyncpa [#allocation6], 0
    %14 = vsyncpa [#allocation9], 0
    %15 = vsyncpa [#allocation4], 0
    // Predicated region
    $region2: #{tpu_custom_call.1} parent=1 // pred_check
      _
    $region3: #{tpu_custom_call.1} parent=1 // pred_check_branch
      %17 = sbr.rel (0) target = $region5
    $region4: #{tpu_custom_call.1} parent=1 // pred_region
      %s19 = ssub.s32 512, 512
      %20 = vsyncadd [#allocation3], %s19
      %s21 = sshll.u32 [#allocation2], 4
      %s22 = int_to_ptr.vmem [resolvable:$true] %s21
      %27 = dma.hbm_to_vmem [thread:$0]  %s0, 512, %s22, [#allocation3], 64, 64, 4
    $region5: #{tpu_custom_call.1} parent=1 // pred_fallthru
      _
    // Predicated region
    $region6: #{tpu_custom_call.1} parent=1 // pred_check
      _
    $region7: #{tpu_custom_call.1} parent=1 // pred_check_branch
      %29 = sbr.rel (0) target = $region9
    $region8: #{tpu_custom_call.1} parent=1 // pred_region
      %s31 = ssub.s32 256, 256
      %32 = vsyncadd [#allocation6], %s31
      %s33 = sshll.u32 [#allocation5], 4
      %s34 = int_to_ptr.vmem [resolvable:$true] %s33
      %39 = dma.hbm_to_vmem [thread:$0]  %s1, 256, %s34, [#allocation6], 128, 128, 8
    $region9: #{tpu_custom_call.1} parent=1 // pred_fallthru
      _
    // Predicated region
    $region10: #{tpu_custom_call.1} parent=1 // pred_check
      _
    $region11: #{tpu_custom_call.1} parent=1 // pred_check_branch
      %41 = sbr.rel (0) target = $region13
    $region12: #{tpu_custom_call.1} parent=1 // pred_region
      _
    $region13: #{tpu_custom_call.1} parent=1 // pred_fallthru
      _
    // Predicated region
    $region14: #{tpu_custom_call.1} parent=1 // pred_check
      _
    $region15: #{tpu_custom_call.1} parent=1 // pred_check_branch
      %43 = sbr.rel (0) target = $region17
    $region16: #{tpu_custom_call.1} parent=1 // pred_region
      %s45 = ssub.s32 256, 256
      %46 = vsyncadd [#allocation6], %s45
      %s47 = sshll.u32 [#allocation7], 4
      %s48 = int_to_ptr.vmem [resolvable:$true] %s47
      %53 = dma.hbm_to_vmem [thread:$0]  %s3, 256, %s48, [#allocation6], 64, 64, 4
    $region17: #{tpu_custom_call.1} parent=1 // pred_fallthru
      _
    // Predicated region
    $region18: #{tpu_custom_call.1} parent=1 // pred_check
      _
    $region19: #{tpu_custom_call.1} parent=1 // pred_check_branch
      %55 = sbr.rel (0) target = $region21
    $region20: #{tpu_custom_call.1} parent=1 // pred_region
      %s57 = ssub.s32 512, 512
      %58 = vsyncadd [#allocation9], %s57
      %s59 = sshll.u32 [#allocation8], 4
      %s60 = int_to_ptr.vmem [resolvable:$true] %s59
      %65 = dma.hbm_to_vmem [thread:$0]  %s4, 512, %s60, [#allocation9], 128, 128, 8
    $region21: #{tpu_custom_call.1} parent=1 // pred_fallthru
      _
    // Predicated region
    $region22: #{tpu_custom_call.1} parent=1 // pred_check
      _
    $region23: #{tpu_custom_call.1} parent=1 // pred_check_branch
      %67 = sbr.rel (0) target = $region25
    $region24: #{tpu_custom_call.1} parent=1 // pred_region
      %s69 = ssub.s32 512, 512
      %70 = vsyncadd [#allocation9], %s69
      %s71 = sshll.u32 [#allocation10], 4
      %s72 = int_to_ptr.vmem [resolvable:$true] %s71
      %77 = dma.hbm_to_vmem [thread:$0]  %s5, 512, %s72, [#allocation9], 128, 128, 8
    $region25: #{tpu_custom_call.1} parent=1 // pred_fallthru
      _
    // Predicated region
    $region26: #{tpu_custom_call.1} parent=1 // pred_check
      _
    $region27: #{tpu_custom_call.1} parent=1 // pred_check_branch
      %79 = sbr.rel (0) target = $region29
    $region28: #{tpu_custom_call.1} parent=1 // pred_region
      _
    $region29: #{tpu_custom_call.1} parent=1 // pred_fallthru
      _
    // Predicated region
    $region30: #{tpu_custom_call.1} parent=1 // pred_check
      _
    $region31: #{tpu_custom_call.1} parent=1 // pred_check_branch
      %81 = sbr.rel (0) target = $region33
    $region32: #{tpu_custom_call.1} parent=1 // pred_region
      %82 = dma.done [#allocation3], 512
    $region33: #{tpu_custom_call.1} parent=1 // pred_fallthru
      _
    // Predicated region
    $region34: #{tpu_custom_call.1} parent=1 // pred_check
      _
    $region35: #{tpu_custom_call.1} parent=1 // pred_check_branch
      %84 = sbr.rel (0) target = $region37
    $region36: #{tpu_custom_call.1} parent=1 // pred_region
      %85 = dma.done [#allocation6], 256
    $region37: #{tpu_custom_call.1} parent=1 // pred_fallthru
      _
    // Predicated region
    $region38: #{tpu_custom_call.1} parent=1 // pred_check
      _
    $region39: #{tpu_custom_call.1} parent=1 // pred_check_branch
      %87 = sbr.rel (0) target = $region41
    $region40: #{tpu_custom_call.1} parent=1 // pred_region
      %88 = dma.done [#allocation6], 256
    $region41: #{tpu_custom_call.1} parent=1 // pred_fallthru
      _
    // Predicated region
    $region42: #{tpu_custom_call.1} parent=1 // pred_check
      _
    $region43: #{tpu_custom_call.1} parent=1 // pred_check_branch
      %90 = sbr.rel (0) target = $region45
    $region44: #{tpu_custom_call.1} parent=1 // pred_region
      %91 = dma.done [#allocation9], 512
    $region45: #{tpu_custom_call.1} parent=1 // pred_fallthru
      _
    // Predicated region
    $region46: #{tpu_custom_call.1} parent=1 // pred_check
      _
    $region47: #{tpu_custom_call.1} parent=1 // pred_check_branch
      %93 = sbr.rel (0) target = $region49
    $region48: #{tpu_custom_call.1} parent=1 // pred_region
      %94 = dma.done [#allocation9], 512
    $region49: #{tpu_custom_call.1} parent=1 // pred_fallthru
      _
    %v96 = vld [vmem:[#allocation2] sm:$0xf]
    %v97 = vld [vmem:[#allocation2 + $0x4] sm:$0xf]
    %v98 = vld [vmem:[#allocation2 + $0x8] sm:$0xf]
    %v99 = vld [vmem:[#allocation2 + $0xc] sm:$0xf]
    %v100 = vld [vmem:[#allocation2 + $0x10] sm:$0xf]
    %v101 = vld [vmem:[#allocation2 + $0x14] sm:$0xf]
    %v102 = vld [vmem:[#allocation2 + $0x18] sm:$0xf]
    %v103 = vld [vmem:[#allocation2 + $0x1c] sm:$0xf]
    %v104 = vld [vmem:[#allocation5] sm:$0xff]
    %v105 = vld [vmem:[#allocation5 + $0x8] sm:$0xff]
    %v106 = vld [vmem:[%s2] sm:$0x3]
    %v108 = vlaneseq
    %v109 = vshrl.u32 %v108, 7
    %v110 = vsub.s32 0, %v109
    %v111 = vrot.slane %v106, %v110
    %v112 = vlaneseq
    %v113 = vshrl.u32 %v112, 7
    %v114 = vsub.s32 1, %v113
    %v115 = vrot.slane %v106, %v114
    %v126 = vunpack.c.l.b16 %v96
    %v127 = vunpack.c.l.b16 %v97
    %v128 = vunpack.c.l.b16 %v98
    %v129 = vunpack.c.l.b16 %v99
    %v130 = vunpack.c.l.b16 %v100
    %v131 = vunpack.c.l.b16 %v101
    %v132 = vunpack.c.l.b16 %v102
    %v133 = vunpack.c.l.b16 %v103
    %v134 = vpack.c.b16 %v127, %v126
    %v135 = vpack.c.b16 %v129, %v128
    %v136 = vpack.c.b16 %v131, %v130
    %v137 = vpack.c.b16 %v133, %v132
    %v140 = vunpack.c.l.b16 %v104
    %v141 = vunpack.c.h.b16 %v104
    %v142 = vunpack.c.l.b16 %v105
    %v143 = vunpack.c.h.b16 %v105
    %v144 = vpack.c.b16 %v142, %v140
    %v145 = vpack.c.b16 %v143, %v141
    %vm148 = vcmask 130048
    %v150 = vsel %vm148, %v134, 0
    %v153 = vsel %vm148, %v135, 0
    %v156 = vsel %vm148, %v136, 0
    %v159 = vsel %vm148, %v137, 0
    %161 = vmatprep.subr.bf16.mxu0 0
    %162 = vmatpush1.bf16.msra.mxu0 0
    %163 = vmatprep.subr.bf16.mxu0 0
    %164 = vmatpush1.bf16.msra.mxu0 0
    %165 = vmatprep.subr.bf16.mxu0 0
    %166 = vmatpush1.bf16.msra.mxu0 0
    %167 = vmatprep.subr.bf16.mxu0 0
    %168 = vmatpush1.bf16.msra.mxu0 0
    %169 = vmatprep.subr.bf16.mxu0 0
    %170 = vmatpush1.bf16.msra.mxu0 0
    %171 = vmatprep.subr.bf16.mxu0 0
    %172 = vmatpush1.bf16.msra.mxu0 0
    %173 = vmatprep.subr.bf16.mxu0 0
    %174 = vmatpush1.bf16.msra.mxu0 0
    %175 = vmatprep.subr.bf16.mxu0 %v145
    %176 = vmatpush1.bf16.msra.mxu0 %v144
    %177 = vmatprep.subr.bf16.mxu0 0
    %178 = vmatpush2.bf16.msra.mxu0 0
    %179 = vmatprep.subr.bf16.mxu0 0
    %180 = vmatpush2.bf16.msra.mxu0 0
    %181 = vmatprep.subr.bf16.mxu0 0
    %182 = vmatpush2.bf16.msra.mxu0 0
    %183 = vmatprep.subr.bf16.mxu0 0
    %184 = vmatpush2.bf16.msra.mxu0 0
    %185 = vmatprep.subr.bf16.mxu0 0
    %186 = vmatpush2.bf16.msra.mxu0 0
    %187 = vmatprep.subr.bf16.mxu0 0
    %188 = vmatpush2.bf16.msra.mxu0 0
    %189 = vmatprep.subr.bf16.mxu0 0
    %190 = vmatpush2.bf16.msra.mxu0 0
    %191 = vmatprep.subr.bf16.mxu0 0
    %192 = vmatpush2.bf16.msra.mxu0 0
    %193 = vmatprep.mubr.bf16.mxu0 0
    %194 = vmatmul.mubr.bf16.gmra.mxu0 %v150
    %v195 = vpop.f32.mrf.mxu0
    %v196 = vadd.f32 %v111, %v195
    %v197 = vpop.f32.mrf.mxu0
    %v198 = vpop.f32.mrf.mxu0
    %v199 = vadd.f32 %v111, %v198
    %v200 = vpop.f32.mrf.mxu0
    %201 = vmatprep.mubr.bf16.mxu0 0
    %202 = vmatmul.mubr.bf16.gmra.mxu0 %v153
    %v203 = vpop.f32.mrf.mxu0
    %v204 = vadd.f32 %v111, %v203
    %v205 = vpop.f32.mrf.mxu0
    %v206 = vpop.f32.mrf.mxu0
    %v207 = vadd.f32 %v111, %v206
    %v208 = vpop.f32.mrf.mxu0
    %209 = vmatprep.mubr.bf16.mxu0 0
    %210 = vmatmul.mubr.bf16.gmra.mxu0 %v156
    %v211 = vpop.f32.mrf.mxu0
    %v212 = vadd.f32 %v111, %v211
    %v213 = vpop.f32.mrf.mxu0
    %v214 = vpop.f32.mrf.mxu0
    %v215 = vadd.f32 %v111, %v214
    %v216 = vpop.f32.mrf.mxu0
    %217 = vmatprep.mubr.bf16.mxu0 0
    %218 = vmatmul.mubr.bf16.gmra.mxu0 %v159
    %v219 = vpop.f32.mrf.mxu0
    %v220 = vadd.f32 %v111, %v219
    %v221 = vpop.f32.mrf.mxu0
    %v222 = vpop.f32.mrf.mxu0
    %v223 = vadd.f32 %v111, %v222
    %v224 = vpop.f32.mrf.mxu0
    %v225 = vadd.f32 %v115, %v224
    %226 = vdwg.mxu0
    %v227 = vld [vmem:[#allocation7] sm:$0xf]
    %v228 = vld [vmem:[#allocation7 + $0x4] sm:$0xf]
    %v229 = vld [vmem:[#allocation7 + $0x8] sm:$0xf]
    %v230 = vld [vmem:[#allocation7 + $0xc] sm:$0xf]
    %v235 = vunpack.c.l.b16 %v227
    %v236 = vunpack.c.l.b16 %v228
    %v237 = vunpack.c.l.b16 %v229
    %v238 = vunpack.c.l.b16 %v230
    %v239 = vpack.c.b16 %v236, %v235
    %v240 = vpack.c.b16 %v238, %v237
    %vm243 = vcmask 261120
    %v245 = vsel %vm243, 0, 0
    %247 = vmatprep.subr.bf16.mxu0 0
    %248 = vmatpush1.bf16.msra.mxu0 0
    %249 = vmatprep.subr.bf16.mxu0 0
    %250 = vmatpush1.bf16.msra.mxu0 0
    %251 = vmatprep.subr.bf16.mxu0 0
    %252 = vmatpush1.bf16.msra.mxu0 0
    %253 = vmatprep.subr.bf16.mxu0 0
    %254 = vmatpush1.bf16.msra.mxu0 0
    %255 = vmatprep.subr.bf16.mxu0 0
    %256 = vmatpush1.bf16.msra.mxu0 0
    %257 = vmatprep.subr.bf16.mxu0 0
    %258 = vmatpush1.bf16.msra.mxu0 0
    %259 = vmatprep.subr.bf16.mxu0 0
    %260 = vmatpush1.bf16.msra.mxu0 %v240
    %261 = vmatprep.subr.bf16.mxu0 0
    %262 = vmatpush1.bf16.msra.mxu0 %v239
    %263 = vmatprep.subr.bf16.mxu0 0
    %264 = vmatpush2.bf16.msra.mxu0 0
    %265 = vmatprep.subr.bf16.mxu0 0
    %266 = vmatpush2.bf16.msra.mxu0 0
    %267 = vmatprep.subr.bf16.mxu0 0
    %268 = vmatpush2.bf16.msra.mxu0 0
    %269 = vmatprep.subr.bf16.mxu0 0
    %270 = vmatpush2.bf16.msra.mxu0 0
    %271 = vmatprep.subr.bf16.mxu0 0
    %272 = vmatpush2.bf16.msra.mxu0 0
    %273 = vmatprep.subr.bf16.mxu0 0
    %274 = vmatpush2.bf16.msra.mxu0 0
    %275 = vmatprep.subr.bf16.mxu0 0
    %276 = vmatpush2.bf16.msra.mxu0 0
    %277 = vmatprep.subr.bf16.mxu0 0
    %278 = vmatpush2.bf16.msra.mxu0 0
    %279 = vmatprep.mubr.bf16.mxu0 0
    %280 = vmatmul.mubr.bf16.gmra.mxu0 %v245
    %v281 = vpop.f32.mrf.mxu0
    %v282 = vadd.f32 0.0, %v281
    %v283 = vpop.f32.mrf.mxu0
    %v284 = vpop.f32.mrf.mxu0
    %v285 = vpop.f32.mrf.mxu0
    %286 = vdwg.mxu0
    %v287 = vadd.f32 %v196, %v282
    %v288 = vxor.u32 %v287, 2147483648
    %v289 = vmul.f32 %v288, 1.442695
    %v290 = vpow.pop %v289
    %v291 = vadd.f32 %v290, 1.0
    %v292 = vrcp.pop %v291
    %v293 = vmul.f32 1.0, %v292
    %v294 = vtanh.pop %v287
    %v295 = vmul.f32 %v293, 0.0
    %297 = vrot.lane.b32.xlu0 %v294, 32
    %v298 = vpop.permute.xlu0 %297
    %v300 = vmul.f32 %v293, %v298
    %302 = vrot.lane.b32.xlu0 %v300, 32
    %v303 = vpop.permute.xlu0 %302
    %v305 = vadd.f32 %v295, %v303
    %v306 = vtanh.pop %v305
    %308 = vrot.lane.b32.xlu0 %v306, 32
    %v309 = vpop.permute.xlu0 %308
    %v311 = vmul.f32 %v293, %v309
    %v312 = vpack.c.bf16 %v311, %v311
    %314 = vrot.lane.b32.xlu0 %v312, 64
    %v315 = vpop.permute.xlu0 %314
    %v317 = vsel %vm243, %v315, 0
    %319 = vmatprep.subr.bf16.mxu0 0
    %320 = vmatpush1.bf16.msra.mxu0 0
    %321 = vmatprep.subr.bf16.mxu0 0
    %322 = vmatpush1.bf16.msra.mxu0 0
    %323 = vmatprep.subr.bf16.mxu0 0
    %324 = vmatpush1.bf16.msra.mxu0 0
    %325 = vmatprep.subr.bf16.mxu0 0
    %326 = vmatpush1.bf16.msra.mxu0 0
    %327 = vmatprep.subr.bf16.mxu0 0
    %328 = vmatpush1.bf16.msra.mxu0 0
    %329 = vmatprep.subr.bf16.mxu0 0
    %330 = vmatpush1.bf16.msra.mxu0 0
    %331 = vmatprep.subr.bf16.mxu0 0
    %332 = vmatpush1.bf16.msra.mxu0 %v240
    %333 = vmatprep.subr.bf16.mxu0 0
    %334 = vmatpush1.bf16.msra.mxu0 %v239
    %335 = vmatprep.subr.bf16.mxu0 0
    %336 = vmatpush2.bf16.msra.mxu0 0
    %337 = vmatprep.subr.bf16.mxu0 0
    %338 = vmatpush2.bf16.msra.mxu0 0
    %339 = vmatprep.subr.bf16.mxu0 0
    %340 = vmatpush2.bf16.msra.mxu0 0
    %341 = vmatprep.subr.bf16.mxu0 0
    %342 = vmatpush2.bf16.msra.mxu0 0
    %343 = vmatprep.subr.bf16.mxu0 0
    %344 = vmatpush2.bf16.msra.mxu0 0
    %345 = vmatprep.subr.bf16.mxu0 0
    %346 = vmatpush2.bf16.msra.mxu0 0
    %347 = vmatprep.subr.bf16.mxu0 0
    %348 = vmatpush2.bf16.msra.mxu0 0
    %349 = vmatprep.subr.bf16.mxu0 0
    %350 = vmatpush2.bf16.msra.mxu0 0
    %351 = vmatprep.mubr.bf16.mxu0 0
    %352 = vmatmul.mubr.bf16.gmra.mxu0 %v317
    %v353 = vpop.f32.mrf.mxu0
    %v354 = vadd.f32 0.0, %v353
    %v355 = vpop.f32.mrf.mxu0
    %v356 = vpop.f32.mrf.mxu0
    %v357 = vpop.f32.mrf.mxu0
    %358 = vdwg.mxu0
    %v359 = vadd.f32 %v199, %v354
    %v360 = vxor.u32 %v359, 2147483648
    %v361 = vmul.f32 %v360, 1.442695
    %v362 = vpow.pop %v361
    %v363 = vadd.f32 %v362, 1.0
    %v364 = vrcp.pop %v363
    %v365 = vmul.f32 1.0, %v364
    %v366 = vtanh.pop %v359
    %v367 = vmul.f32 %v365, %v305
    %369 = vrot.lane.b32.xlu0 %v366, 32
    %v370 = vpop.permute.xlu0 %369
    %v372 = vmul.f32 %v365, %v370
    %374 = vrot.lane.b32.xlu0 %v372, 32
    %v375 = vpop.permute.xlu0 %374
    %v377 = vadd.f32 %v367, %v375
    %v378 = vtanh.pop %v377
    %380 = vrot.lane.b32.xlu0 %v378, 32
    %v381 = vpop.permute.xlu0 %380
    %v383 = vmul.f32 %v365, %v381
    %v384 = vpack.c.bf16 %v383, %v383
    %386 = vrot.lane.b32.xlu0 %v384, 64
    %v387 = vpop.permute.xlu0 %386
    %v389 = vsel %vm243, %v387, 0
    %391 = vmatprep.subr.bf16.mxu0 0
    %392 = vmatpush1.bf16.msra.mxu0 0
    %393 = vmatprep.subr.bf16.mxu0 0
    %394 = vmatpush1.bf16.msra.mxu0 0
    %395 = vmatprep.subr.bf16.mxu0 0
    %396 = vmatpush1.bf16.msra.mxu0 0
    %397 = vmatprep.subr.bf16.mxu0 0
    %398 = vmatpush1.bf16.msra.mxu0 0
    %399 = vmatprep.subr.bf16.mxu0 0
    %400 = vmatpush1.bf16.msra.mxu0 0
    %401 = vmatprep.subr.bf16.mxu0 0
    %402 = vmatpush1.bf16.msra.mxu0 0
    %403 = vmatprep.subr.bf16.mxu0 0
    %404 = vmatpush1.bf16.msra.mxu0 %v240
    %405 = vmatprep.subr.bf16.mxu0 0
    %406 = vmatpush1.bf16.msra.mxu0 %v239
    %407 = vmatprep.subr.bf16.mxu0 0
    %408 = vmatpush2.bf16.msra.mxu0 0
    %409 = vmatprep.subr.bf16.mxu0 0
    %410 = vmatpush2.bf16.msra.mxu0 0
    %411 = vmatprep.subr.bf16.mxu0 0
    %412 = vmatpush2.bf16.msra.mxu0 0
    %413 = vmatprep.subr.bf16.mxu0 0
    %414 = vmatpush2.bf16.msra.mxu0 0
    %415 = vmatprep.subr.bf16.mxu0 0
    %416 = vmatpush2.bf16.msra.mxu0 0
    %417 = vmatprep.subr.bf16.mxu0 0
    %418 = vmatpush2.bf16.msra.mxu0 0
    %419 = vmatprep.subr.bf16.mxu0 0
    %420 = vmatpush2.bf16.msra.mxu0 0
    %421 = vmatprep.subr.bf16.mxu0 0
    %422 = vmatpush2.bf16.msra.mxu0 0
    %423 = vmatprep.mubr.bf16.mxu0 0
    %424 = vmatmul.mubr.bf16.gmra.mxu0 %v389
    %v425 = vpop.f32.mrf.mxu0
    %v426 = vadd.f32 0.0, %v425
    %v427 = vpop.f32.mrf.mxu0
    %v428 = vpop.f32.mrf.mxu0
    %v429 = vpop.f32.mrf.mxu0
    %430 = vdwg.mxu0
    %v431 = vadd.f32 %v204, %v426
    %v432 = vxor.u32 %v431, 2147483648
    %v433 = vmul.f32 %v432, 1.442695
    %v434 = vpow.pop %v433
    %v435 = vadd.f32 %v434, 1.0
    %v436 = vrcp.pop %v435
    %v437 = vmul.f32 1.0, %v436
    %v438 = vtanh.pop %v431
    %v439 = vmul.f32 %v437, %v377
    %441 = vrot.lane.b32.xlu0 %v438, 32
    %v442 = vpop.permute.xlu0 %441
    %v444 = vmul.f32 %v437, %v442
    %446 = vrot.lane.b32.xlu0 %v444, 32
    %v447 = vpop.permute.xlu0 %446
    %v449 = vadd.f32 %v439, %v447
    %v450 = vtanh.pop %v449
    %452 = vrot.lane.b32.xlu0 %v450, 32
    %v453 = vpop.permute.xlu0 %452
    %v455 = vmul.f32 %v437, %v453
    %v456 = vpack.c.bf16 %v455, %v455
    %458 = vrot.lane.b32.xlu0 %v456, 64
    %v459 = vpop.permute.xlu0 %458
    %v461 = vsel %vm243, %v459, 0
    %463 = vmatprep.subr.bf16.mxu0 0
    %464 = vmatpush1.bf16.msra.mxu0 0
    %465 = vmatprep.subr.bf16.mxu0 0
    %466 = vmatpush1.bf16.msra.mxu0 0
    %467 = vmatprep.subr.bf16.mxu0 0
    %468 = vmatpush1.bf16.msra.mxu0 0
    %469 = vmatprep.subr.bf16.mxu0 0
    %470 = vmatpush1.bf16.msra.mxu0 0
    %471 = vmatprep.subr.bf16.mxu0 0
    %472 = vmatpush1.bf16.msra.mxu0 0
    %473 = vmatprep.subr.bf16.mxu0 0
    %474 = vmatpush1.bf16.msra.mxu0 0
    %475 = vmatprep.subr.bf16.mxu0 0
    %476 = vmatpush1.bf16.msra.mxu0 %v240
    %477 = vmatprep.subr.bf16.mxu0 0
    %478 = vmatpush1.bf16.msra.mxu0 %v239
    %479 = vmatprep.subr.bf16.mxu0 0
    %480 = vmatpush2.bf16.msra.mxu0 0
    %481 = vmatprep.subr.bf16.mxu0 0
    %482 = vmatpush2.bf16.msra.mxu0 0
    %483 = vmatprep.subr.bf16.mxu0 0
    %484 = vmatpush2.bf16.msra.mxu0 0
    %485 = vmatprep.subr.bf16.mxu0 0
    %486 = vmatpush2.bf16.msra.mxu0 0
    %487 = vmatprep.subr.bf16.mxu0 0
    %488 = vmatpush2.bf16.msra.mxu0 0
    %489 = vmatprep.subr.bf16.mxu0 0
    %490 = vmatpush2.bf16.msra.mxu0 0
    %491 = vmatprep.subr.bf16.mxu0 0
    %492 = vmatpush2.bf16.msra.mxu0 0
    %493 = vmatprep.subr.bf16.mxu0 0
    %494 = vmatpush2.bf16.msra.mxu0 0
    %495 = vmatprep.mubr.bf16.mxu0 0
    %496 = vmatmul.mubr.bf16.gmra.mxu0 %v461
    %v497 = vpop.f32.mrf.mxu0
    %v498 = vadd.f32 0.0, %v497
    %v499 = vpop.f32.mrf.mxu0
    %v500 = vpop.f32.mrf.mxu0
    %v501 = vpop.f32.mrf.mxu0
    %502 = vdwg.mxu0
    %v503 = vadd.f32 %v207, %v498
    %v504 = vxor.u32 %v503, 2147483648
    %v505 = vmul.f32 %v504, 1.442695
    %v506 = vpow.pop %v505
    %v507 = vadd.f32 %v506, 1.0
    %v508 = vrcp.pop %v507
    %v509 = vmul.f32 1.0, %v508
    %v510 = vtanh.pop %v503
    %v511 = vmul.f32 %v509, %v449
    %513 = vrot.lane.b32.xlu0 %v510, 32
    %v514 = vpop.permute.xlu0 %513
    %v516 = vmul.f32 %v509, %v514
    %518 = vrot.lane.b32.xlu0 %v516, 32
    %v519 = vpop.permute.xlu0 %518
    %v521 = vadd.f32 %v511, %v519
    %v522 = vtanh.pop %v521
    %524 = vrot.lane.b32.xlu0 %v522, 32
    %v525 = vpop.permute.xlu0 %524
    %v527 = vmul.f32 %v509, %v525
    %v528 = vpack.c.bf16 %v527, %v527
    %530 = vrot.lane.b32.xlu0 %v528, 64
    %v531 = vpop.permute.xlu0 %530
    %v533 = vsel %vm243, %v531, 0
    %535 = vmatprep.subr.bf16.mxu0 0
    %536 = vmatpush1.bf16.msra.mxu0 0
    %537 = vmatprep.subr.bf16.mxu0 0
    %538 = vmatpush1.bf16.msra.mxu0 0
    %539 = vmatprep.subr.bf16.mxu0 0
    %540 = vmatpush1.bf16.msra.mxu0 0
    %541 = vmatprep.subr.bf16.mxu0 0
    %542 = vmatpush1.bf16.msra.mxu0 0
    %543 = vmatprep.subr.bf16.mxu0 0
    %544 = vmatpush1.bf16.msra.mxu0 0
    %545 = vmatprep.subr.bf16.mxu0 0
    %546 = vmatpush1.bf16.msra.mxu0 0
    %547 = vmatprep.subr.bf16.mxu0 0
    %548 = vmatpush1.bf16.msra.mxu0 %v240
    %549 = vmatprep.subr.bf16.mxu0 0
    %550 = vmatpush1.bf16.msra.mxu0 %v239
    %551 = vmatprep.subr.bf16.mxu0 0
    %552 = vmatpush2.bf16.msra.mxu0 0
    %553 = vmatprep.subr.bf16.mxu0 0
    %554 = vmatpush2.bf16.msra.mxu0 0
    %555 = vmatprep.subr.bf16.mxu0 0
    %556 = vmatpush2.bf16.msra.mxu0 0
    %557 = vmatprep.subr.bf16.mxu0 0
    %558 = vmatpush2.bf16.msra.mxu0 0
    %559 = vmatprep.subr.bf16.mxu0 0
    %560 = vmatpush2.bf16.msra.mxu0 0
    %561 = vmatprep.subr.bf16.mxu0 0
    %562 = vmatpush2.bf16.msra.mxu0 0
    %563 = vmatprep.subr.bf16.mxu0 0
    %564 = vmatpush2.bf16.msra.mxu0 0
    %565 = vmatprep.subr.bf16.mxu0 0
    %566 = vmatpush2.bf16.msra.mxu0 0
    %567 = vmatprep.mubr.bf16.mxu0 0
    %568 = vmatmul.mubr.bf16.gmra.mxu0 %v533
    %v569 = vpop.f32.mrf.mxu0
    %v570 = vadd.f32 0.0, %v569
    %v571 = vpop.f32.mrf.mxu0
    %v572 = vpop.f32.mrf.mxu0
    %v573 = vpop.f32.mrf.mxu0
    %574 = vdwg.mxu0
    %v575 = vadd.f32 %v212, %v570
    %v576 = vxor.u32 %v575, 2147483648
    %v577 = vmul.f32 %v576, 1.442695
    %v578 = vpow.pop %v577
    %v579 = vadd.f32 %v578, 1.0
    %v580 = vrcp.pop %v579
    %v581 = vmul.f32 1.0, %v580
    %v582 = vtanh.pop %v575
    %v583 = vmul.f32 %v581, %v521
    %585 = vrot.lane.b32.xlu0 %v582, 32
    %v586 = vpop.permute.xlu0 %585
    %v588 = vmul.f32 %v581, %v586
    %590 = vrot.lane.b32.xlu0 %v588, 32
    %v591 = vpop.permute.xlu0 %590
    %v593 = vadd.f32 %v583, %v591
    %v594 = vtanh.pop %v593
    %596 = vrot.lane.b32.xlu0 %v594, 32
    %v597 = vpop.permute.xlu0 %596
    %v599 = vmul.f32 %v581, %v597
    %v600 = vpack.c.bf16 %v599, %v599
    %602 = vrot.lane.b32.xlu0 %v600, 64
    %v603 = vpop.permute.xlu0 %602
    %v605 = vsel %vm243, %v603, 0
    %607 = vmatprep.subr.bf16.mxu0 0
    %608 = vmatpush1.bf16.msra.mxu0 0
    %609 = vmatprep.subr.bf16.mxu0 0
    %610 = vmatpush1.bf16.msra.mxu0 0
    %611 = vmatprep.subr.bf16.mxu0 0
    %612 = vmatpush1.bf16.msra.mxu0 0
    %613 = vmatprep.subr.bf16.mxu0 0
    %614 = vmatpush1.bf16.msra.mxu0 0
    %615 = vmatprep.subr.bf16.mxu0 0
    %616 = vmatpush1.bf16.msra.mxu0 0
    %617 = vmatprep.subr.bf16.mxu0 0
    %618 = vmatpush1.bf16.msra.mxu0 0
    %619 = vmatprep.subr.bf16.mxu0 0
    %620 = vmatpush1.bf16.msra.mxu0 %v240
    %621 = vmatprep.subr.bf16.mxu0 0
    %622 = vmatpush1.bf16.msra.mxu0 %v239
    %623 = vmatprep.subr.bf16.mxu0 0
    %624 = vmatpush2.bf16.msra.mxu0 0
    %625 = vmatprep.subr.bf16.mxu0 0
    %626 = vmatpush2.bf16.msra.mxu0 0
    %627 = vmatprep.subr.bf16.mxu0 0
    %628 = vmatpush2.bf16.msra.mxu0 0
    %629 = vmatprep.subr.bf16.mxu0 0
    %630 = vmatpush2.bf16.msra.mxu0 0
    %631 = vmatprep.subr.bf16.mxu0 0
    %632 = vmatpush2.bf16.msra.mxu0 0
    %633 = vmatprep.subr.bf16.mxu0 0
    %634 = vmatpush2.bf16.msra.mxu0 0
    %635 = vmatprep.subr.bf16.mxu0 0
    %636 = vmatpush2.bf16.msra.mxu0 0
    %637 = vmatprep.subr.bf16.mxu0 0
    %638 = vmatpush2.bf16.msra.mxu0 0
    %639 = vmatprep.mubr.bf16.mxu0 0
    %640 = vmatmul.mubr.bf16.gmra.mxu0 %v605
    %v641 = vpop.f32.mrf.mxu0
    %v642 = vadd.f32 0.0, %v641
    %v643 = vpop.f32.mrf.mxu0
    %v644 = vpop.f32.mrf.mxu0
    %v645 = vpop.f32.mrf.mxu0
    %646 = vdwg.mxu0
    %v647 = vadd.f32 %v215, %v642
    %v648 = vxor.u32 %v647, 2147483648
    %v649 = vmul.f32 %v648, 1.442695
    %v650 = vpow.pop %v649
    %v651 = vadd.f32 %v650, 1.0
    %v652 = vrcp.pop %v651
    %v653 = vmul.f32 1.0, %v652
    %v654 = vtanh.pop %v647
    %v655 = vmul.f32 %v653, %v593
    %657 = vrot.lane.b32.xlu0 %v654, 32
    %v658 = vpop.permute.xlu0 %657
    %v660 = vmul.f32 %v653, %v658
    %662 = vrot.lane.b32.xlu0 %v660, 32
    %v663 = vpop.permute.xlu0 %662
    %v665 = vadd.f32 %v655, %v663
    %v666 = vtanh.pop %v665
    %668 = vrot.lane.b32.xlu0 %v666, 32
    %v669 = vpop.permute.xlu0 %668
    %v671 = vmul.f32 %v653, %v669
    %v672 = vpack.c.bf16 %v671, %v671
    %674 = vrot.lane.b32.xlu0 %v672, 64
    %v675 = vpop.permute.xlu0 %674
    %v677 = vsel %vm243, %v675, 0
    %679 = vmatprep.subr.bf16.mxu0 0
    %680 = vmatpush1.bf16.msra.mxu0 0
    %681 = vmatprep.subr.bf16.mxu0 0
    %682 = vmatpush1.bf16.msra.mxu0 0
    %683 = vmatprep.subr.bf16.mxu0 0
    %684 = vmatpush1.bf16.msra.mxu0 0
    %685 = vmatprep.subr.bf16.mxu0 0
    %686 = vmatpush1.bf16.msra.mxu0 0
    %687 = vmatprep.subr.bf16.mxu0 0
    %688 = vmatpush1.bf16.msra.mxu0 0
    %689 = vmatprep.subr.bf16.mxu0 0
    %690 = vmatpush1.bf16.msra.mxu0 0
    %691 = vmatprep.subr.bf16.mxu0 0
    %692 = vmatpush1.bf16.msra.mxu0 %v240
    %693 = vmatprep.subr.bf16.mxu0 0
    %694 = vmatpush1.bf16.msra.mxu0 %v239
    %695 = vmatprep.subr.bf16.mxu0 0
    %696 = vmatpush2.bf16.msra.mxu0 0
    %697 = vmatprep.subr.bf16.mxu0 0
    %698 = vmatpush2.bf16.msra.mxu0 0
    %699 = vmatprep.subr.bf16.mxu0 0
    %700 = vmatpush2.bf16.msra.mxu0 0
    %701 = vmatprep.subr.bf16.mxu0 0
    %702 = vmatpush2.bf16.msra.mxu0 0
    %703 = vmatprep.subr.bf16.mxu0 0
    %704 = vmatpush2.bf16.msra.mxu0 0
    %705 = vmatprep.subr.bf16.mxu0 0
    %706 = vmatpush2.bf16.msra.mxu0 0
    %707 = vmatprep.subr.bf16.mxu0 0
    %708 = vmatpush2.bf16.msra.mxu0 0
    %709 = vmatprep.subr.bf16.mxu0 0
    %710 = vmatpush2.bf16.msra.mxu0 0
    %711 = vmatprep.mubr.bf16.mxu0 0
    %712 = vmatmul.mubr.bf16.gmra.mxu0 %v677
    %v713 = vpop.f32.mrf.mxu0
    %v714 = vadd.f32 0.0, %v713
    %v715 = vpop.f32.mrf.mxu0
    %v716 = vpop.f32.mrf.mxu0
    %v717 = vpop.f32.mrf.mxu0
    %718 = vdwg.mxu0
    %v719 = vadd.f32 %v220, %v714
    %v720 = vxor.u32 %v719, 2147483648
    %v721 = vmul.f32 %v720, 1.442695
    %v722 = vpow.pop %v721
    %v723 = vadd.f32 %v722, 1.0
    %v724 = vrcp.pop %v723
    %v725 = vmul.f32 1.0, %v724
    %v726 = vtanh.pop %v719
    %v727 = vmul.f32 %v725, %v665
    %729 = vrot.lane.b32.xlu0 %v726, 32
    %v730 = vpop.permute.xlu0 %729
    %v732 = vmul.f32 %v725, %v730
    %734 = vrot.lane.b32.xlu0 %v732, 32
    %v735 = vpop.permute.xlu0 %734
    %v737 = vadd.f32 %v727, %v735
    %v738 = vtanh.pop %v737
    %740 = vrot.lane.b32.xlu0 %v738, 32
    %v741 = vpop.permute.xlu0 %740
    %v743 = vmul.f32 %v725, %v741
    %v744 = vpack.c.bf16 %v743, %v743
    %746 = vrot.lane.b32.xlu0 %v744, 64
    %v747 = vpop.permute.xlu0 %746
    %v749 = vsel %vm243, %v747, 0
    %751 = vmatprep.subr.bf16.mxu0 0
    %752 = vmatpush1.bf16.msra.mxu0 0
    %753 = vmatprep.subr.bf16.mxu0 0
    %754 = vmatpush1.bf16.msra.mxu0 0
    %755 = vmatprep.subr.bf16.mxu0 0
    %756 = vmatpush1.bf16.msra.mxu0 0
    %757 = vmatprep.subr.bf16.mxu0 0
    %758 = vmatpush1.bf16.msra.mxu0 0
    %759 = vmatprep.subr.bf16.mxu0 0
    %760 = vmatpush1.bf16.msra.mxu0 0
    %761 = vmatprep.subr.bf16.mxu0 0
    %762 = vmatpush1.bf16.msra.mxu0 0
    %763 = vmatprep.subr.bf16.mxu0 0
    %764 = vmatpush1.bf16.msra.mxu0 %v240
    %765 = vmatprep.subr.bf16.mxu0 0
    %766 = vmatpush1.bf16.msra.mxu0 %v239
    %767 = vmatprep.subr.bf16.mxu0 0
    %768 = vmatpush2.bf16.msra.mxu0 0
    %769 = vmatprep.subr.bf16.mxu0 0
    %770 = vmatpush2.bf16.msra.mxu0 0
    %771 = vmatprep.subr.bf16.mxu0 0
    %772 = vmatpush2.bf16.msra.mxu0 0
    %773 = vmatprep.subr.bf16.mxu0 0
    %774 = vmatpush2.bf16.msra.mxu0 0
    %775 = vmatprep.subr.bf16.mxu0 0
    %776 = vmatpush2.bf16.msra.mxu0 0
    %777 = vmatprep.subr.bf16.mxu0 0
    %778 = vmatpush2.bf16.msra.mxu0 0
    %779 = vmatprep.subr.bf16.mxu0 0
    %780 = vmatpush2.bf16.msra.mxu0 0
    %781 = vmatprep.subr.bf16.mxu0 0
    %782 = vmatpush2.bf16.msra.mxu0 0
    %783 = vmatprep.mubr.bf16.mxu0 0
    %784 = vmatmul.mubr.bf16.gmra.mxu0 %v749
    %v785 = vpop.f32.mrf.mxu0
    %v786 = vadd.f32 0.0, %v785
    %v787 = vpop.f32.mrf.mxu0
    %v788 = vpop.f32.mrf.mxu0
    %v789 = vpop.f32.mrf.mxu0
    %790 = vdwg.mxu0
    %v791 = vadd.f32 %v223, %v786
    %v792 = vxor.u32 %v791, 2147483648
    %v793 = vmul.f32 %v792, 1.442695
    %v794 = vpow.pop %v793
    %v795 = vadd.f32 %v794, 1.0
    %v796 = vrcp.pop %v795
    %v797 = vmul.f32 1.0, %v796
    %v798 = vtanh.pop %v791
    %v799 = vmul.f32 %v797, %v737
    %801 = vrot.lane.b32.xlu0 %v798, 32
    %v802 = vpop.permute.xlu0 %801
    %v804 = vmul.f32 %v797, %v802
    %806 = vrot.lane.b32.xlu0 %v804, 32
    %v807 = vpop.permute.xlu0 %806
    %v809 = vadd.f32 %v799, %v807
    %v810 = vtanh.pop %v809
    %812 = vrot.lane.b32.xlu0 %v810, 32
    %v813 = vpop.permute.xlu0 %812
    %v815 = vmul.f32 %v797, %v813
    %v816 = vxor.u32 %v225, 2147483648
    %v817 = vmul.f32 %v816, 1.442695
    %v818 = vpow.pop %v817
    %v819 = vadd.f32 %v818, 1.0
    %v820 = vrcp.pop %v819
    %v821 = vmul.f32 1.0, %v820
    %v822 = vtanh.pop %v225
    %824 = vrot.lane.b32.xlu0 %v822, 32
    %v825 = vpop.permute.xlu0 %824
    %v827 = vmul.f32 %v821, %v825
    %v828 = vtanh.pop %v827
    %830 = vrot.lane.b32.xlu0 %v828, 64
    %v831 = vpop.permute.xlu0 %830
    %v833 = vmul.f32 %v821, %v831
    %v834 = vld [vmem:[#allocation8] sm:$0xff]
    %v835 = vld [vmem:[#allocation8 + $0x8] sm:$0xff]
    %v836 = vld [vmem:[#allocation8 + $0x10] sm:$0xff]
    %v837 = vld [vmem:[#allocation8 + $0x18] sm:$0xff]
    %v838 = vld [vmem:[#allocation10] sm:$0xff]
    %v839 = vld [vmem:[#allocation10 + $0x8] sm:$0xff]
    %v840 = vld [vmem:[#allocation10 + $0x10] sm:$0xff]
    %v841 = vld [vmem:[#allocation10 + $0x18] sm:$0xff]
    %843 = vrot.lane.b32.xlu0 %v833, 64
    %v844 = vpop.permute.xlu0 %843
    %v845 = vsel %vm243, %v844, 0
    %847 = vmatprep.subr.mxu0 0.0
    %848 = vmatpush1.msra.mxu0 0.0
    %849 = vmatprep.subr.mxu0 0.0
    %850 = vmatpush1.msra.mxu0 0.0
    %851 = vmatprep.subr.mxu0 0.0
    %852 = vmatpush1.msra.mxu0 0.0
    %853 = vmatprep.subr.mxu0 0.0
    %854 = vmatpush1.msra.mxu0 0.0
    %855 = vmatprep.subr.mxu0 0.0
    %856 = vmatpush1.msra.mxu0 0.0
    %857 = vmatprep.subr.mxu0 0.0
    %858 = vmatpush1.msra.mxu0 0.0
    %859 = vmatprep.subr.mxu0 0.0
    %860 = vmatpush1.msra.mxu0 0.0
    %861 = vmatprep.subr.mxu0 0.0
    %862 = vmatpush1.msra.mxu0 0.0
    %863 = vmatprep.subr.mxu0 0.0
    %864 = vmatpush1.msra.mxu0 0.0
    %865 = vmatprep.subr.mxu0 0.0
    %866 = vmatpush1.msra.mxu0 0.0
    %867 = vmatprep.subr.mxu0 0.0
    %868 = vmatpush1.msra.mxu0 0.0
    %869 = vmatprep.subr.mxu0 0.0
    %870 = vmatpush1.msra.mxu0 0.0
    %871 = vmatprep.subr.mxu0 0.0
    %872 = vmatpush1.msra.mxu0 %v841
    %873 = vmatprep.subr.mxu0 0.0
    %874 = vmatpush1.msra.mxu0 %v840
    %875 = vmatprep.subr.mxu0 0.0
    %876 = vmatpush1.msra.mxu0 %v839
    %877 = vmatprep.subr.mxu0 0.0
    %878 = vmatpush1.msra.mxu0 %v838
    %879 = vmatprep.subr.mxu0 0.0
    %880 = vmatpush2.msra.mxu0 0.0
    %881 = vmatprep.subr.mxu0 0.0
    %882 = vmatpush2.msra.mxu0 0.0
    %883 = vmatprep.subr.mxu0 0.0
    %884 = vmatpush2.msra.mxu0 0.0
    %885 = vmatprep.subr.mxu0 0.0
    %886 = vmatpush2.msra.mxu0 0.0
    %887 = vmatprep.subr.mxu0 0.0
    %888 = vmatpush2.msra.mxu0 0.0
    %889 = vmatprep.subr.mxu0 0.0
    %890 = vmatpush2.msra.mxu0 0.0
    %891 = vmatprep.subr.mxu0 0.0
    %892 = vmatpush2.msra.mxu0 0.0
    %893 = vmatprep.subr.mxu0 0.0
    %894 = vmatpush2.msra.mxu0 0.0
    %895 = vmatprep.subr.mxu0 0.0
    %896 = vmatpush2.msra.mxu0 0.0
    %897 = vmatprep.subr.mxu0 0.0
    %898 = vmatpush2.msra.mxu0 0.0
    %899 = vmatprep.subr.mxu0 0.0
    %900 = vmatpush2.msra.mxu0 0.0
    %901 = vmatprep.subr.mxu0 0.0
    %902 = vmatpush2.msra.mxu0 0.0
    %903 = vmatprep.subr.mxu0 0.0
    %904 = vmatpush2.msra.mxu0 0.0
    %905 = vmatprep.subr.mxu0 0.0
    %906 = vmatpush2.msra.mxu0 0.0
    %907 = vmatprep.subr.mxu0 0.0
    %908 = vmatpush2.msra.mxu0 0.0
    %909 = vmatprep.subr.mxu0 0.0
    %910 = vmatpush2.msra.mxu0 0.0
    %911 = vmatprep.mubr.f32.mxu0 0.0
    %912 = vmatmul.mubr.f32.gmra.mxu0 %v845
    %v913 = vpop.f32.mrf.mxu0
    %v914 = vadd.f32 0.0, %v913
    %v915 = vpop.f32.mrf.mxu0
    %916 = vdwg.mxu0
    %918 = vrot.lane.b32.xlu0 %v815, 64
    %v919 = vpop.permute.xlu0 %918
    %v920 = vsel %vm243, %v919, 0
    %922 = vmatprep.subr.mxu0 0.0
    %923 = vmatpush1.msra.mxu0 0.0
    %924 = vmatprep.subr.mxu0 0.0
    %925 = vmatpush1.msra.mxu0 0.0
    %926 = vmatprep.subr.mxu0 0.0
    %927 = vmatpush1.msra.mxu0 0.0
    %928 = vmatprep.subr.mxu0 0.0
    %929 = vmatpush1.msra.mxu0 0.0
    %930 = vmatprep.subr.mxu0 0.0
    %931 = vmatpush1.msra.mxu0 0.0
    %932 = vmatprep.subr.mxu0 0.0
    %933 = vmatpush1.msra.mxu0 0.0
    %934 = vmatprep.subr.mxu0 0.0
    %935 = vmatpush1.msra.mxu0 0.0
    %936 = vmatprep.subr.mxu0 0.0
    %937 = vmatpush1.msra.mxu0 0.0
    %938 = vmatprep.subr.mxu0 0.0
    %939 = vmatpush1.msra.mxu0 0.0
    %940 = vmatprep.subr.mxu0 0.0
    %941 = vmatpush1.msra.mxu0 0.0
    %942 = vmatprep.subr.mxu0 0.0
    %943 = vmatpush1.msra.mxu0 0.0
    %944 = vmatprep.subr.mxu0 0.0
    %945 = vmatpush1.msra.mxu0 0.0
    %946 = vmatprep.subr.mxu0 0.0
    %947 = vmatpush1.msra.mxu0 %v837
    %948 = vmatprep.subr.mxu0 0.0
    %949 = vmatpush1.msra.mxu0 %v836
    %950 = vmatprep.subr.mxu0 0.0
    %951 = vmatpush1.msra.mxu0 %v835
    %952 = vmatprep.subr.mxu0 0.0
    %953 = vmatpush1.msra.mxu0 %v834
    %954 = vmatprep.subr.mxu0 0.0
    %955 = vmatpush2.msra.mxu0 0.0
    %956 = vmatprep.subr.mxu0 0.0
    %957 = vmatpush2.msra.mxu0 0.0
    %958 = vmatprep.subr.mxu0 0.0
    %959 = vmatpush2.msra.mxu0 0.0
    %960 = vmatprep.subr.mxu0 0.0
    %961 = vmatpush2.msra.mxu0 0.0
    %962 = vmatprep.subr.mxu0 0.0
    %963 = vmatpush2.msra.mxu0 0.0
    %964 = vmatprep.subr.mxu0 0.0
    %965 = vmatpush2.msra.mxu0 0.0
    %966 = vmatprep.subr.mxu0 0.0
    %967 = vmatpush2.msra.mxu0 0.0
    %968 = vmatprep.subr.mxu0 0.0
    %969 = vmatpush2.msra.mxu0 0.0
    %970 = vmatprep.subr.mxu0 0.0
    %971 = vmatpush2.msra.mxu0 0.0
    %972 = vmatprep.subr.mxu0 0.0
    %973 = vmatpush2.msra.mxu0 0.0
    %974 = vmatprep.subr.mxu0 0.0
    %975 = vmatpush2.msra.mxu0 0.0
    %976 = vmatprep.subr.mxu0 0.0
    %977 = vmatpush2.msra.mxu0 0.0
    %978 = vmatprep.subr.mxu0 0.0
    %979 = vmatpush2.msra.mxu0 0.0
    %980 = vmatprep.subr.mxu0 0.0
    %981 = vmatpush2.msra.mxu0 0.0
    %982 = vmatprep.subr.mxu0 0.0
    %983 = vmatpush2.msra.mxu0 0.0
    %984 = vmatprep.subr.mxu0 0.0
    %985 = vmatpush2.msra.mxu0 0.0
    %986 = vmatprep.mubr.f32.mxu0 0.0
    %987 = vmatmul.mubr.f32.gmra.mxu0 %v920
    %v988 = vpop.f32.mrf.mxu0
    %v989 = vadd.f32 %v914, %v988
    %v990 = vpop.f32.mrf.mxu0
    %991 = vdwg.mxu0
    %v992 = vld [vmem:[%s6] sm:$0x1]
    %v994 = vlaneseq
    %v995 = vshrl.u32 %v994, 7
    %v996 = vsub.s32 0, %v995
    %v997 = vrot.slane %v992, %v996
    %v999 = vadd.f32 %v989, %v997
    %v1000 = vxor.u32 %v999, 2147483648
    %v1001 = vmul.f32 %v1000, 1.442695
    %v1002 = vpow.pop %v1001
    %v1003 = vadd.f32 %v1002, 1.0
    %v1004 = vrcp.pop %v1003
    %v1005 = vmul.f32 1.0, %v1004
    %1006 = vst [vmem:[#allocation11] sm:$0xff] %v1005
    // Predicated region
    $region50: #{tpu_custom_call.1} parent=1 // pred_check
      _
    $region51: #{tpu_custom_call.1} parent=1 // pred_check_branch
      %1008 = sbr.rel (0) target = $region53
    $region52: #{tpu_custom_call.1} parent=1 // pred_region
      %s1010 = ssub.s32 128, 128
      %1011 = vsyncadd [#allocation4], %s1010
      %s1013 = sshll.u32 [#allocation11], 4
      %s1014 = int_to_ptr.vmem [resolvable:$true] %s1013
      %1016 = dma.vmem_to_hbm [thread:$0]  %s1014, 128, %s7, [#allocation4]
    $region53: #{tpu_custom_call.1} parent=1 // pred_fallthru
      _
    // Predicated region
    $region54: #{tpu_custom_call.1} parent=1 // pred_check
      _
    $region55: #{tpu_custom_call.1} parent=1 // pred_check_branch
      %1018 = sbr.rel (0) target = $region57
    $region56: #{tpu_custom_call.1} parent=1 // pred_region
      %1019 = dma.done [#allocation4], 128
    $region57: #{tpu_custom_call.1} parent=1 // pred_fallthru
      _
    %1020 = vsyncpa [#allocation3], 1
    %1021 = vsyncpa [#allocation6], 1
    %1022 = vsyncpa [#allocation9], 1
    %1023 = vsyncpa [#allocation4], 1

</llo_original>
